<compile_context>
chip_gen: v7x
topology: tpu7x:2x2x1
jax: 0.10.0
libtpu: 0.0.40
codegen_flags: <defaults>
</compile_context>

<pallas_src>
import functools
import math

import jax
import jax.numpy as jnp
from jax.experimental import pallas as pl
from jax.experimental.pallas import tpu as pltpu


# ----------------------------------------------------------------------------
# Pallas kernels
# ----------------------------------------------------------------------------
def _fused_chain_kernel(*refs, n_stages: int):
    """out[Cn, Mt] = relu(Wn @ ... relu(W1 @ x + b1) ... + bn).

    refs = (x_ref, w1, b1, ..., wn, bn, o_ref).  Weights/biases are tiny and
    VMEM-resident (constant index_map -> DMA'd once).  M sits on the lane axis
    so all loads/stores are dense full-lane accesses; intermediates never
    touch HBM.
    """
    x_ref, o_ref = refs[0], refs[-1]
    y = x_ref[...]
    for s in range(n_stages):
        w = refs[1 + 2 * s][...]
        b = refs[2 + 2 * s][...]                     # (Cout, 1) broadcast over lanes
        y = jnp.dot(w, y, preferred_element_type=jnp.float32) + b
        y = jnp.maximum(y, 0.0)
    o_ref[...] = y.astype(o_ref.dtype)


def _conv_only_kernel(x_ref, w_ref, o_ref):
    # upscale == 1 path: plain bias-free conv1x1, no ReLU.
    o_ref[...] = jnp.dot(w_ref[...], x_ref[...],
                         preferred_element_type=jnp.float32).astype(o_ref.dtype)


def _pick_tile_m(m: int, bytes_per_col: int, budget: int = 12 << 20) -> int:
    """Largest lane tile <= m fitting the VMEM budget; full extent when m<=128."""
    if m <= 128:
        return m
    for tm in (4096, 2048, 1024, 512, 256, 128):
        if tm <= m and tm * bytes_per_col <= budget:
            return tm
    return 128


# ----------------------------------------------------------------------------
# Weight permutations for the deferred pixel_shuffle
# ----------------------------------------------------------------------------
def _perm_rows_deferred_shuffle(w, nc):
    # conv output channel index c*4 + p  (p = 2*i + j)  ->  p*nc + c
    cin = w.shape[1]
    return w.reshape(nc, 4, cin).transpose(1, 0, 2).reshape(4 * nc, cin)


def _perm_bias_deferred_shuffle(b, nc):
    return b.reshape(nc, 4).T.reshape(4 * nc)


# ----------------------------------------------------------------------------
# Parameters (deterministic test data)
# ----------------------------------------------------------------------------
def make_params(key, conv_in_ch, num_classes, upscale):
    n = int(round(math.log2(upscale))) if upscale > 1 else 0
    keys = jax.random.split(key, 1 + 2 * max(n, 1))

    # conv1x1: [out=num_classes, in=conv_in_ch], kaiming, bias=False (as in PS_UP)
    w0 = math.sqrt(2.0 / conv_in_ch) * jax.random.normal(
        keys[0], (num_classes, conv_in_ch), dtype=jnp.float32)

    ps = []
    for s in range(n):
        # NOTE: PyTorch uses ICNR init (groups of 4 identical rows).  Forward
        # semantics do not depend on init values; fully random rows are used
        # here so the self-test actually exercises the deferred-shuffle row
        # permutation (identical rows would mask permutation bugs).
        w = math.sqrt(2.0 / num_classes) * jax.random.normal(
            keys[1 + 2 * s], (4 * num_classes, num_classes), dtype=jnp.float32)
        bound = 1.0 / math.sqrt(num_classes)
        b = jax.random.uniform(keys[2 + 2 * s], (4 * num_classes,),
                               minval=-bound, maxval=bound, dtype=jnp.float32)
        ps.append((w, b))
    return {"w0": w0, "ps": ps}


# ----------------------------------------------------------------------------
# PS_UP forward (single fused kernel + one deferred depth-to-space)
# ----------------------------------------------------------------------------
def ps_up_forward(x_nchw, params, upscale):
    n = int(round(math.log2(upscale))) if upscale > 1 else 0
    x = x_nchw.astype(jnp.float32)
    B, Cin, H, W = x.shape
    nc = params["w0"].shape[0]
    M = H * W
    x3 = x.reshape(B, Cin, M)                        # NCHW used directly (free reshape)

    if n == 0:
        tm = _pick_tile_m(M, 4 * 2 * (Cin + nc))
        y = pl.pallas_call(
            _conv_only_kernel,
            out_shape=jax.ShapeDtypeStruct((B, nc, M), jnp.float32),
            grid_spec=pltpu.PrefetchScalarGridSpec(
                num_scalar_prefetch=0,
                grid=(B, pl.cdiv(M, tm)),
                in_specs=[pl.BlockSpec((None, Cin, tm), lambda bi, mi: (bi, 0, mi)),
                          pl.BlockSpec((nc, Cin), lambda bi, mi: (0, 0))],
                out_specs=pl.BlockSpec((None, nc, tm), lambda bi, mi: (bi, 0, mi))),
            compiler_params=pltpu.CompilerParams(
                dimension_semantics=("parallel", "parallel"),
                vmem_limit_bytes=32 << 20),
        )(x3, params["w0"])
        return y.reshape(B, nc, H, W)

    # --- Host-side weight prep (tiny matrices, traced once under jit) -------
    # Stage 1: fold the bias-free conv1x1 into the first PixelShuffle conv.
    w1, b1 = params["ps"][0]
    weights = [jnp.dot(_perm_rows_deferred_shuffle(w1, nc), params["w0"],
                       precision=jax.lax.Precision.HIGHEST)]            # [4nc, Cin]
    biases = [_perm_bias_deferred_shuffle(b1, nc).reshape(-1, 1)]
    # Stages 2..n: grouped conv -> block-diagonal weight; channel layout stays
    # (p1, ..., ps, c), so all per-stage pixel_shuffles collapse into one
    # depth-to-space at the end.
    for s in range(1, n):
        ws, bs = params["ps"][s]
        wp = _perm_rows_deferred_shuffle(ws, nc)                         # [4nc, nc]
        bp = _perm_bias_deferred_shuffle(bs, nc)
        G = 4 ** s
        weights.append(jnp.kron(jnp.eye(G, dtype=wp.dtype), wp))        # [G*4nc, G*nc]
        biases.append(jnp.tile(bp, G).reshape(-1, 1))

    chans = [w.shape[0] for w in weights]
    cout = chans[-1]                                                     # 4^n * nc
    bytes_per_col = 4 * (2 * Cin + 2 * cout + sum(chans[:-1]))
    tm = _pick_tile_m(M, bytes_per_col)

    in_specs = [pl.BlockSpec((None, Cin, tm), lambda bi, mi: (bi, 0, mi))]
    args = [x3]
    for w, bvec in zip(weights, biases):
        co, ci = w.shape
        in_specs.append(pl.BlockSpec((co, ci), lambda bi, mi: (0, 0)))   # resident
        in_specs.append(pl.BlockSpec((co, 1), lambda bi, mi: (0, 0)))    # resident
        args += [w, bvec]

    y = pl.pallas_call(
        functools.partial(_fused_chain_kernel, n_stages=n),
        out_shape=jax.ShapeDtypeStruct((B, cout, M), jnp.float32),
        grid_spec=pltpu.PrefetchScalarGridSpec(
            num_scalar_prefetch=0,
            grid=(B, pl.cdiv(M, tm)),
            in_specs=in_specs,
            out_specs=pl.BlockSpec((None, cout, tm), lambda bi, mi: (bi, 0, mi))),
        compiler_params=pltpu.CompilerParams(
            dimension_semantics=("parallel", "parallel"),
            vmem_limit_bytes=32 << 20),
    )(*args)

    # Single deferred depth-to-space replacing all per-stage pixel_shuffles.
    # TODO(synk): the final interleaving transpose stays in XLA; expressing the
    # strided sub-pixel scatter inside the kernel would force masked/strided
    # lane stores.
    y = y.reshape((B,) + (2, 2) * n + (nc, H, W))    # (b, i1,j1,...,in,jn, c, h, w)
    perm = ([0, 2 * n + 1, 2 * n + 2]                # b, c, h
            + [2 * s + 1 for s in range(n)]          # i1..in
            + [2 * n + 3]                            # w
            + [2 * s + 2 for s in range(n)])         # j1..jn
    y = jnp.transpose(y, perm)
    return y.reshape(B, nc, H * (2 ** n), W * (2 ** n))


# ----------------------------------------------------------------------------
# Pure-JAX reference (literal PyTorch path: conv -> relu -> pixel_shuffle)
# ----------------------------------------------------------------------------
def reference_forward(x_nchw, params):
    x = x_nchw.astype(jnp.float32)
    y = jnp.einsum("oc,bchw->bohw", params["w0"], x)          # conv1x1, no bias
    for w, b in params["ps"]:
        z = jnp.einsum("oc,bchw->bohw", w, y) + b[None, :, None, None]
        z = jnp.maximum(z, 0.0)
        Bz, c4, h, ww = z.shape
        ncc = c4 // 4
        z = z.reshape(Bz, ncc, 2, 2, h, ww)
        z = jnp.transpose(z, (0, 1, 4, 2, 5, 3))
        y = z.reshape(Bz, ncc, h * 2, ww * 2)
    return y


if __name__ == "__main__":
    # PS_UP(upscale=4, conv_in_ch=32, num_classes=4) on a small NCHW input.
    upscale = 4
    conv_in_ch = 32
    num_classes = 4

    key = jax.random.PRNGKey(0)
    k_x, k_p = jax.random.split(key)
    x = jax.random.normal(k_x, (2, conv_in_ch, 16, 16), dtype=jnp.float32)  # NCHW
    params = make_params(k_p, conv_in_ch, num_classes, upscale)

    fwd = jax.jit(functools.partial(ps_up_forward, upscale=upscale))
    out = jax.block_until_ready(fwd(x, params))

    expected_shape = (2, num_classes, 16 * upscale, 16 * upscale)
    assert out.shape == expected_shape, (out.shape, expected_shape)

    ref = jax.block_until_ready(reference_forward(x, params))
    max_diff = float(jnp.max(jnp.abs(out - ref)))
    # Loose tolerance: TPU MXU matmul precision + algebraic W1@W0 fusion.
    assert jnp.allclose(out, ref, atol=5e-2, rtol=5e-2), max_diff

    print("KERNEL_OK")
</pallas_src>

<mosaic_0001>
module attributes {stable_mosaic.version = 11 : i64} {
  func.func @_fused_chain_kernel(%arg0: i32, %arg1: i32, %arg2: memref<1x32x256xf32, #tpu.memory_space<vmem>>, %arg3: memref<16x32xf32, #tpu.memory_space<vmem>>, %arg4: memref<16x1xf32, #tpu.memory_space<vmem>>, %arg5: memref<64x16xf32, #tpu.memory_space<vmem>>, %arg6: memref<64x1xf32, #tpu.memory_space<vmem>>, %arg7: memref<1x64x256xf32, #tpu.memory_space<vmem>>) attributes {dimension_semantics = [#tpu.dimension_semantics<parallel>, #tpu.dimension_semantics<parallel>], iteration_bounds = array<i64: 2, 1>, scalar_prefetch = 0 : i64, scratch_operands = 0 : i64, tpu.core_type = #tpu.core_type<tc>, window_params = [{transform_indices = @transform_0, window_bounds = array<i64: 1, 32, 256>}, {pipeline_mode = #tpu.pipeline_mode<synchronous>, transform_indices = @transform_1, window_bounds = array<i64: 16, 32>}, {pipeline_mode = #tpu.pipeline_mode<synchronous>, transform_indices = @transform_2, window_bounds = array<i64: 16, 1>}, {pipeline_mode = #tpu.pipeline_mode<synchronous>, transform_indices = @transform_3, window_bounds = array<i64: 64, 16>}, {pipeline_mode = #tpu.pipeline_mode<synchronous>, transform_indices = @transform_4, window_bounds = array<i64: 64, 1>}, {transform_indices = @transform_5, window_bounds = array<i64: 1, 64, 256>}]} {
    %c0 = arith.constant 0 : index
    %c0_0 = arith.constant 0 : index
    %c0_1 = arith.constant 0 : index
    %0 = vector.load %arg2[%c0, %c0_0, %c0_1] : memref<1x32x256xf32, #tpu.memory_space<vmem>>, vector<1x32x256xf32>
    %1 = vector.shape_cast %0 : vector<1x32x256xf32> to vector<32x256xf32>
    %c0_2 = arith.constant 0 : index
    %c0_3 = arith.constant 0 : index
    %2 = vector.load %arg3[%c0_2, %c0_3] : memref<16x32xf32, #tpu.memory_space<vmem>>, vector<16x32xf32>
    %c0_4 = arith.constant 0 : index
    %c0_5 = arith.constant 0 : index
    %3 = vector.load %arg4[%c0_4, %c0_5] : memref<16x1xf32, #tpu.memory_space<vmem>>, vector<16x1xf32>
    %cst = arith.constant dense<0.000000e+00> : vector<16x256xf32>
    %4 = tpu.matmul %2, %1, %cst {dimension_numbers = #tpu.dot_dimension_numbers<[1], [0], [0], [1], [0, 0, 1, 1], [], []>} : vector<16x32xf32>, vector<32x256xf32>, vector<16x256xf32> -> vector<16x256xf32>
    %5 = vector.broadcast %3 : vector<16x1xf32> to vector<16x256xf32>
    %6 = arith.addf %4, %5 : vector<16x256xf32>
    %cst_6 = arith.constant 0.000000e+00 : f32
    %7 = vector.broadcast %cst_6 : f32 to vector<16x256xf32>
    %8 = arith.maximumf %6, %7 : vector<16x256xf32>
    %c0_7 = arith.constant 0 : index
    %c0_8 = arith.constant 0 : index
    %9 = vector.load %arg5[%c0_7, %c0_8] : memref<64x16xf32, #tpu.memory_space<vmem>>, vector<64x16xf32>
    %c0_9 = arith.constant 0 : index
    %c0_10 = arith.constant 0 : index
    %10 = vector.load %arg6[%c0_9, %c0_10] : memref<64x1xf32, #tpu.memory_space<vmem>>, vector<64x1xf32>
    %cst_11 = arith.constant dense<0.000000e+00> : vector<64x256xf32>
    %11 = tpu.matmul %9, %8, %cst_11 {dimension_numbers = #tpu.dot_dimension_numbers<[1], [0], [0], [1], [0, 0, 1, 1], [], []>} : vector<64x16xf32>, vector<16x256xf32>, vector<64x256xf32> -> vector<64x256xf32>
    %12 = vector.broadcast %10 : vector<64x1xf32> to vector<64x256xf32>
    %13 = arith.addf %11, %12 : vector<64x256xf32>
    %cst_12 = arith.constant 0.000000e+00 : f32
    %14 = vector.broadcast %cst_12 : f32 to vector<64x256xf32>
    %15 = arith.maximumf %13, %14 : vector<64x256xf32>
    %c0_13 = arith.constant 0 : index
    %c0_14 = arith.constant 0 : index
    %c0_15 = arith.constant 0 : index
    %16 = vector.load %arg7[%c0_13, %c0_14, %c0_15] : memref<1x64x256xf32, #tpu.memory_space<vmem>>, vector<1x64x256xf32>
    %17 = vector.shape_cast %16 : vector<1x64x256xf32> to vector<64x256xf32>
    %18 = vector.shape_cast %15 : vector<64x256xf32> to vector<1x64x256xf32>
    tpu.vector_store %arg7[%c0_13, %c0_14, %c0_15], %18 {strides = array<i32>} : memref<1x64x256xf32, #tpu.memory_space<vmem>>, vector<1x64x256xf32>,
    return
  }
  func.func @transform_0(%arg0: i32, %arg1: i32) -> (i32, i32, i32) {
    %c0_i32 = arith.constant 0 : i32
    %c0_i32_0 = arith.constant 0 : i32
    return %arg0, %c0_i32, %arg1 : i32, i32, i32
  }
  func.func @transform_1(%arg0: i32, %arg1: i32) -> (i32, i32) {
    %c0_i32 = arith.constant 0 : i32
    %c0_i32_0 = arith.constant 0 : i32
    %c0_i32_1 = arith.constant 0 : i32
    return %c0_i32, %c0_i32_0 : i32, i32
  }
  func.func @transform_2(%arg0: i32, %arg1: i32) -> (i32, i32) {
    %c0_i32 = arith.constant 0 : i32
    %c0_i32_0 = arith.constant 0 : i32
    %c0_i32_1 = arith.constant 0 : i32
    return %c0_i32, %c0_i32_0 : i32, i32
  }
  func.func @transform_3(%arg0: i32, %arg1: i32) -> (i32, i32) {
    %c0_i32 = arith.constant 0 : i32
    %c0_i32_0 = arith.constant 0 : i32
    %c0_i32_1 = arith.constant 0 : i32
    return %c0_i32, %c0_i32_0 : i32, i32
  }
  func.func @transform_4(%arg0: i32, %arg1: i32) -> (i32, i32) {
    %c0_i32 = arith.constant 0 : i32
    %c0_i32_0 = arith.constant 0 : i32
    %c0_i32_1 = arith.constant 0 : i32
    return %c0_i32, %c0_i32_0 : i32, i32
  }
  func.func @transform_5(%arg0: i32, %arg1: i32) -> (i32, i32, i32) {
    %c0_i32 = arith.constant 0 : i32
    %c0_i32_0 = arith.constant 0 : i32
    return %arg0, %c0_i32, %arg1 : i32, i32, i32
  }
}

</mosaic_0001>

<llo_original>
// kernel: tile.6
$region0: #{tile.6}
  #allocation0 [shape = 's32[1]{0}', space=sflag, size = 0x4, scoped, tag = 'scoped memory for tile.6']
  %s0 = inlined_call_operand.vmem [shape: f32[16], index: 0, kind: input, shape index: {}]
  %s1 = inlined_call_operand.vmem [shape: f32[4,16], index: 1, kind: output, shape index: {}]
  // Predicated region
  $region2: #{tile.6} parent=0 // pred_check
    _
  $region3: #{tile.6} parent=0 // pred_check_branch
    %3 = sbr.rel (0) target = $region5
  $region4: #{tile.6} parent=0 // pred_region
    _
  $region5: #{tile.6} parent=0 // pred_fallthru
    _
  %v4 = vld [vmem:[%s0] ss:$0 sm:$0xff]
  %5 = vst [vmem:[%s1] sm:$0xf] %v4

// kernel: tile.5
$region0: #{tile.5}
  %s0 = inlined_call_operand.vmem [shape: f32[4,4], index: 0, kind: input, shape index: {}]
  %s1 = inlined_call_operand.vmem [shape: f32[16], index: 1, kind: output, shape index: {}]
  $region1: #{tile.5} parent=0
    #allocation0 [shape = 'u8[4096]{0}', space=vmem, size = 0x1000, scoped, tag = 'scoped mem for output reshape']
    #allocation1 [shape = 'u8[4096]{0}', space=vmem, size = 0x1000, scoped, tag = 'scoped mem for input reshape']
    %s3 = sshllo.u32 0, 4
    %v4 = vld [vmem:[%s0] sm:%s3]
    %5 = vst [vmem:[#allocation1] sm:%s3] %v4
    %v6 = vld [vmem:[#allocation1] sm:$0x1]
    %vm7 = vcmask 31744
    %8 = vst.msk [vmem:[#allocation0] sm:$0x1] %vm7, %v6
    %s9 = scalar_lea.vmem [#allocation1], 3
    %v10 = vld [vmem:[%s9] sm:$0x1]
    %11 = vrot.lane.b32.xlu0 %v10, 12
    %v12 = vpop.permute.xlu0 %11
    %vm13 = vcmask 130144
    %14 = vst.msk [vmem:[#allocation0] sm:$0x1] %vm13, %v12
    %s15 = scalar_lea.vmem [#allocation1], 2
    %v16 = vld [vmem:[%s15] sm:$0x1]
    %17 = vrot.lane.b32.xlu0 %v16, 8
    %v18 = vpop.permute.xlu0 %17
    %vm19 = vcmask 97344
    %20 = vst.msk [vmem:[#allocation0] sm:$0x1] %vm19, %v18
    %s21 = scalar_lea.vmem [#allocation1], 1
    %v22 = vld [vmem:[%s21] sm:$0x1]
    %23 = vrot.lane.b32.xlu0 %v22, 4
    %v24 = vpop.permute.xlu0 %23
    %vm25 = vcmask 64544
    %26 = vst.msk [vmem:[#allocation0] sm:$0x1] %vm25, %v24
    %s28 = sshllo.u32 0, 1
    %v30 = vld [vmem:[#allocation0] sm:%s28]
    %s31 = sshllo.u32 0, 1
    %32 = vst [vmem:[%s1] sm:%s31] %v30

// kernel: tile.0
$region0: #{tile.0}
  %s0 = inlined_call_operand.vmem [shape: f32[4,16], index: 0, kind: input, shape index: {}]
  %s1 = inlined_call_operand.vmem [shape: f32[64,1], index: 1, kind: output, shape index: {}]
  $region1: #{tile.0} parent=0
    #allocation0 [shape = 'u8[4096]{0}', space=vmem, size = 0x1000, scoped, tag = 'scoped mem for input reshape']
    %s3 = sshllo.u32 0, 4
    %v4 = vld [vmem:[%s0] sm:%s3]
    %5 = vst [vmem:[#allocation0] sm:%s3] %v4
    %v6 = vld [vmem:[#allocation0] sm:$0xf]
    %vm7 = vcmask 7168
    %8 = vst.msk [vmem:[%s1] ss:$16 sm:$0x3] %vm7, %v6
    %9 = vst.msk [vmem:[%s1] ss:$16 sm:$0xc] %vm7, %v6
    %v10 = vld [vmem:[#allocation0] sm:$0xf]
    %11 = vrot.lane.b32.xlu0 %v10, 127
    %v12 = vpop.permute.xlu0 %11
    %vm13 = vcmask 7168
    %s14 = scalar_lea.vmem %s1, 1
    %15 = vst.msk [vmem:[%s14] ss:$16 sm:$0x3] %vm13, %v12
    %s16 = scalar_lea.vmem %s1, 1
    %17 = vst.msk [vmem:[%s16] ss:$16 sm:$0xc] %vm13, %v12
    %v18 = vld [vmem:[#allocation0] sm:$0xf]
    %19 = vrot.lane.b32.xlu0 %v18, 126
    %v20 = vpop.permute.xlu0 %19
    %vm21 = vcmask 7168
    %s22 = scalar_lea.vmem %s1, 2
    %23 = vst.msk [vmem:[%s22] ss:$16 sm:$0x3] %vm21, %v20
    %s24 = scalar_lea.vmem %s1, 2
    %25 = vst.msk [vmem:[%s24] ss:$16 sm:$0xc] %vm21, %v20
    %v26 = vld [vmem:[#allocation0] sm:$0xf]
    %27 = vrot.lane.b32.xlu0 %v26, 125
    %v28 = vpop.permute.xlu0 %27
    %vm29 = vcmask 7168
    %s30 = scalar_lea.vmem %s1, 3
    %31 = vst.msk [vmem:[%s30] ss:$16 sm:$0x3] %vm29, %v28
    %s32 = scalar_lea.vmem %s1, 3
    %33 = vst.msk [vmem:[%s32] ss:$16 sm:$0xc] %vm29, %v28
    %v34 = vld [vmem:[#allocation0] sm:$0xf]
    %35 = vrot.lane.b32.xlu0 %v34, 124
    %v36 = vpop.permute.xlu0 %35
    %vm37 = vcmask 7168
    %s38 = scalar_lea.vmem %s1, 4
    %39 = vst.msk [vmem:[%s38] ss:$16 sm:$0x3] %vm37, %v36
    %s40 = scalar_lea.vmem %s1, 4
    %41 = vst.msk [vmem:[%s40] ss:$16 sm:$0xc] %vm37, %v36
    %v42 = vld [vmem:[#allocation0] sm:$0xf]
    %43 = vrot.lane.b32.xlu0 %v42, 123
    %v44 = vpop.permute.xlu0 %43
    %vm45 = vcmask 7168
    %s46 = scalar_lea.vmem %s1, 5
    %47 = vst.msk [vmem:[%s46] ss:$16 sm:$0x3] %vm45, %v44
    %s48 = scalar_lea.vmem %s1, 5
    %49 = vst.msk [vmem:[%s48] ss:$16 sm:$0xc] %vm45, %v44
    %v50 = vld [vmem:[#allocation0] sm:$0xf]
    %51 = vrot.lane.b32.xlu0 %v50, 122
    %v52 = vpop.permute.xlu0 %51
    %vm53 = vcmask 7168
    %s54 = scalar_lea.vmem %s1, 6
    %55 = vst.msk [vmem:[%s54] ss:$16 sm:$0x3] %vm53, %v52
    %s56 = scalar_lea.vmem %s1, 6
    %57 = vst.msk [vmem:[%s56] ss:$16 sm:$0xc] %vm53, %v52
    %v58 = vld [vmem:[#allocation0] sm:$0xf]
    %59 = vrot.lane.b32.xlu0 %v58, 121
    %v60 = vpop.permute.xlu0 %59
    %vm61 = vcmask 7168
    %s62 = scalar_lea.vmem %s1, 7
    %63 = vst.msk [vmem:[%s62] ss:$16 sm:$0x3] %vm61, %v60
    %s64 = scalar_lea.vmem %s1, 7
    %65 = vst.msk [vmem:[%s64] ss:$16 sm:$0xc] %vm61, %v60
    %v66 = vld [vmem:[#allocation0] sm:$0xf]
    %67 = vrot.lane.b32.xlu0 %v66, 120
    %v68 = vpop.permute.xlu0 %67
    %vm69 = vcmask 7168
    %s70 = scalar_lea.vmem %s1, 8
    %71 = vst.msk [vmem:[%s70] ss:$16 sm:$0x3] %vm69, %v68
    %s72 = scalar_lea.vmem %s1, 8
    %73 = vst.msk [vmem:[%s72] ss:$16 sm:$0xc] %vm69, %v68
    %v74 = vld [vmem:[#allocation0] sm:$0xf]
    %75 = vrot.lane.b32.xlu0 %v74, 119
    %v76 = vpop.permute.xlu0 %75
    %vm77 = vcmask 7168
    %s78 = scalar_lea.vmem %s1, 9
    %79 = vst.msk [vmem:[%s78] ss:$16 sm:$0x3] %vm77, %v76
    %s80 = scalar_lea.vmem %s1, 9
    %81 = vst.msk [vmem:[%s80] ss:$16 sm:$0xc] %vm77, %v76
    %v82 = vld [vmem:[#allocation0] sm:$0xf]
    %83 = vrot.lane.b32.xlu0 %v82, 118
    %v84 = vpop.permute.xlu0 %83
    %vm85 = vcmask 7168
    %s86 = scalar_lea.vmem %s1, 10
    %87 = vst.msk [vmem:[%s86] ss:$16 sm:$0x3] %vm85, %v84
    %s88 = scalar_lea.vmem %s1, 10
    %89 = vst.msk [vmem:[%s88] ss:$16 sm:$0xc] %vm85, %v84
    %v90 = vld [vmem:[#allocation0] sm:$0xf]
    %91 = vrot.lane.b32.xlu0 %v90, 117
    %v92 = vpop.permute.xlu0 %91
    %vm93 = vcmask 7168
    %s94 = scalar_lea.vmem %s1, 11
    %95 = vst.msk [vmem:[%s94] ss:$16 sm:$0x3] %vm93, %v92
    %s96 = scalar_lea.vmem %s1, 11
    %97 = vst.msk [vmem:[%s96] ss:$16 sm:$0xc] %vm93, %v92
    %v98 = vld [vmem:[#allocation0] sm:$0xf]
    %99 = vrot.lane.b32.xlu0 %v98, 116
    %v100 = vpop.permute.xlu0 %99
    %vm101 = vcmask 7168
    %s102 = scalar_lea.vmem %s1, 12
    %103 = vst.msk [vmem:[%s102] ss:$16 sm:$0x3] %vm101, %v100
    %s104 = scalar_lea.vmem %s1, 12
    %105 = vst.msk [vmem:[%s104] ss:$16 sm:$0xc] %vm101, %v100
    %v106 = vld [vmem:[#allocation0] sm:$0xf]
    %107 = vrot.lane.b32.xlu0 %v106, 115
    %v108 = vpop.permute.xlu0 %107
    %vm109 = vcmask 7168
    %s110 = scalar_lea.vmem %s1, 13
    %111 = vst.msk [vmem:[%s110] ss:$16 sm:$0x3] %vm109, %v108
    %s112 = scalar_lea.vmem %s1, 13
    %113 = vst.msk [vmem:[%s112] ss:$16 sm:$0xc] %vm109, %v108
    %v114 = vld [vmem:[#allocation0] sm:$0xf]
    %115 = vrot.lane.b32.xlu0 %v114, 114
    %v116 = vpop.permute.xlu0 %115
    %vm117 = vcmask 7168
    %s118 = scalar_lea.vmem %s1, 14
    %119 = vst.msk [vmem:[%s118] ss:$16 sm:$0x3] %vm117, %v116
    %s120 = scalar_lea.vmem %s1, 14
    %121 = vst.msk [vmem:[%s120] ss:$16 sm:$0xc] %vm117, %v116
    %v122 = vld [vmem:[#allocation0] sm:$0xf]
    %123 = vrot.lane.b32.xlu0 %v122, 113
    %v124 = vpop.permute.xlu0 %123
    %vm125 = vcmask 7168
    %s126 = scalar_lea.vmem %s1, 15
    %127 = vst.msk [vmem:[%s126] ss:$16 sm:$0x3] %vm125, %v124
    %s128 = scalar_lea.vmem %s1, 15
    %129 = vst.msk [vmem:[%s128] ss:$16 sm:$0xc] %vm125, %v124

// kernel: ps_up_forward.1
$region0: #{ps_up_forward.1}
  #allocation0 [shape = 'u32[]', space=smem, size = 0x4, offset = 0x4, fixed_abs, tag = 'smem constant byte address 0x4 - core index']
  #allocation1 [shape = 'u32[144,128]{1,0:T(1,128)}', space=vmem, size = 0x12000, scoped, tag = 'internal scratch']
  %s0 = inlined_call_operand.vmem [shape: f32[2,32,256], index: 0, kind: input, shape index: {}]
  %s1 = inlined_call_operand.vmem [shape: f32[16,32], index: 1, kind: input, shape index: {}]
  %s2 = inlined_call_operand.vmem [shape: f32[16,1], index: 2, kind: input, shape index: {}]
  %s3 = inlined_call_operand.vmem [shape: f32[64,16], index: 3, kind: input, shape index: {}]
  %s4 = inlined_call_operand.vmem [shape: f32[64,1], index: 4, kind: input, shape index: {}]
  %s5 = inlined_call_operand.vmem [shape: f32[2,64,256], index: 5, kind: output, shape index: {}]
  %s6 = sld [smem:[#allocation0]]
  $region53: #{ps_up_forward.1} parent=0
    _
  %s8 = ssub.s32 1, %s6
  %s9 = scalar_select 0, %s8, %s6
  loop: start=0, step=1, limit=4
  $region2: #{ps_up_forward.1} parent=0 // loop_pre_header
    _
  $region3: #{ps_up_forward.1} parent=0 // loop_header
    %s11 = sphi 0, %s15
    %p12 = scmp.ge.s32.totalorder %s11, 4
    %s18 = sphi 0, %s30
    %s19 = sphi 0, %s26
    %s20 = sphi 0, %s18
    %s21 = sphi 0, %s19
    %s22 = sphi 0, %s20
    %s23 = sphi 0, %s21
    %s35 = sphi 0, %s37
    %s38 = sphi 0, %s35
    %s39 = sphi 0, %s38
    %s55 = sphi 0, %s39
    %s59 = sphi 0, %s59
    %s61 = sphi 0, %s59
    %s62 = sphi 0, %s61
    %s76 = sphi 0, %s62
    %s80 = sphi 0, %s80
    %s82 = sphi 0, %s80
    %s83 = sphi 0, %s82
    %s97 = sphi 0, %s83
    %s101 = sphi 0, %s101
    %s103 = sphi 0, %s101
    %s104 = sphi 0, %s103
    %s118 = sphi 0, %s104
    %s122 = sphi 0, %s122
    %s124 = sphi 0, %s122
    %s125 = sphi 0, %s124
    %s139 = sphi 0, %s125
    %s147 = sphi 0, %s149
    %s150 = sphi 0, %s147
    %s151 = sphi 0, %s150
    %s167 = sphi 0, %s151
  $region4: #{ps_up_forward.1} parent=0 // loop_header_branch
    %14 = sbr.rel (%p12) target = $region8
  $region5: #{ps_up_forward.1} parent=0 // loop_body
    %s16 = ssub.s32 %s11, 1
    %s17 = ssub.s32 %s11, 2
    %s24 = sadd.s32 1, %s19
    %p25 = scmp.ge.s32.totalorder %s24, 1
    %s26 = scalar_select %p25, 0, %s24
    %s27 = sadd.s32 1, %s18
    %s28 = scalar_select %p25, %s27, %s18
    %p29 = scmp.ge.s32.totalorder %s28, 2
    %s30 = scalar_select %p29, 0, %s28
    %s31 = ssub.s32 %s18, %s30
    %s32 = ssub.s32 %s19, %s26
    %s33 = sor.u32 %s31, %s32
    %p34 = scmp.eq.s32.totalorder %s33, 0
    %s36 = sadd.s32 %s35, 1
    %s37 = scalar_select %p34, %s35, %s36
    %p40 = pneg %p34
    %p41 = scmp.eq.s32.totalorder %s11, 1
    %p42 = por %p40, %p41
    %p43 = scmp.ne.s32.totalorder %s35, %s38
    %p44 = scmp.eq.s32.totalorder %s11, 0
    %p45 = por %p43, %p44
    %p46 = scmp.ne.s32.totalorder %s35, %s38
    %p47 = scmp.eq.s32.totalorder %s16, 1
    %p48 = por %p46, %p47
    %p49 = scmp.ne.s32.totalorder %s38, %s39
    %p50 = scmp.eq.s32.totalorder %s16, 0
    %p51 = por %p49, %p50
    %p52 = scmp.ne.s32.totalorder %s38, %s39
    %p53 = scmp.eq.s32.totalorder %s17, 1
    %p54 = por %p52, %p53
    %p56 = scmp.ne.s32.totalorder %s39, %s55
    %p57 = scmp.eq.s32.totalorder %s17, 0
    %p58 = por %p56, %p57
    %s60 = sadd.s32 %s59, 1
    %p63 = scmp.eq.s32.totalorder %s11, 1
    %p64 = scmp.ne.s32.totalorder %s59, %s61
    %p65 = scmp.eq.s32.totalorder %s11, 0
    %p66 = por %p64, %p65
    %p67 = scmp.ne.s32.totalorder %s59, %s61
    %p68 = scmp.eq.s32.totalorder %s16, 1
    %p69 = por %p67, %p68
    %p70 = scmp.ne.s32.totalorder %s61, %s62
    %p71 = scmp.eq.s32.totalorder %s16, 0
    %p72 = por %p70, %p71
    %p73 = scmp.ne.s32.totalorder %s61, %s62
    %p74 = scmp.eq.s32.totalorder %s17, 1
    %p75 = por %p73, %p74
    %p77 = scmp.ne.s32.totalorder %s62, %s76
    %p78 = scmp.eq.s32.totalorder %s17, 0
    %p79 = por %p77, %p78
    %s81 = sadd.s32 %s80, 1
    %p84 = scmp.eq.s32.totalorder %s11, 1
    %p85 = scmp.ne.s32.totalorder %s80, %s82
    %p86 = scmp.eq.s32.totalorder %s11, 0
    %p87 = por %p85, %p86
    %p88 = scmp.ne.s32.totalorder %s80, %s82
    %p89 = scmp.eq.s32.totalorder %s16, 1
    %p90 = por %p88, %p89
    %p91 = scmp.ne.s32.totalorder %s82, %s83
    %p92 = scmp.eq.s32.totalorder %s16, 0
    %p93 = por %p91, %p92
    %p94 = scmp.ne.s32.totalorder %s82, %s83
    %p95 = scmp.eq.s32.totalorder %s17, 1
    %p96 = por %p94, %p95
    %p98 = scmp.ne.s32.totalorder %s83, %s97
    %p99 = scmp.eq.s32.totalorder %s17, 0
    %p100 = por %p98, %p99
    %s102 = sadd.s32 %s101, 1
    %p105 = scmp.eq.s32.totalorder %s11, 1
    %p106 = scmp.ne.s32.totalorder %s101, %s103
    %p107 = scmp.eq.s32.totalorder %s11, 0
    %p108 = por %p106, %p107
    %p109 = scmp.ne.s32.totalorder %s101, %s103
    %p110 = scmp.eq.s32.totalorder %s16, 1
    %p111 = por %p109, %p110
    %p112 = scmp.ne.s32.totalorder %s103, %s104
    %p113 = scmp.eq.s32.totalorder %s16, 0
    %p114 = por %p112, %p113
    %p115 = scmp.ne.s32.totalorder %s103, %s104
    %p116 = scmp.eq.s32.totalorder %s17, 1
    %p117 = por %p115, %p116
    %p119 = scmp.ne.s32.totalorder %s104, %s118
    %p120 = scmp.eq.s32.totalorder %s17, 0
    %p121 = por %p119, %p120
    %s123 = sadd.s32 %s122, 1
    %p126 = scmp.eq.s32.totalorder %s11, 1
    %p127 = scmp.ne.s32.totalorder %s122, %s124
    %p128 = scmp.eq.s32.totalorder %s11, 0
    %p129 = por %p127, %p128
    %p130 = scmp.ne.s32.totalorder %s122, %s124
    %p131 = scmp.eq.s32.totalorder %s16, 1
    %p132 = por %p130, %p131
    %p133 = scmp.ne.s32.totalorder %s124, %s125
    %p134 = scmp.eq.s32.totalorder %s16, 0
    %p135 = por %p133, %p134
    %p136 = scmp.ne.s32.totalorder %s124, %s125
    %p137 = scmp.eq.s32.totalorder %s17, 1
    %p138 = por %p136, %p137
    %p140 = scmp.ne.s32.totalorder %s125, %s139
    %p141 = scmp.eq.s32.totalorder %s17, 0
    %p142 = por %p140, %p141
    %s143 = ssub.s32 %s18, %s30
    %s144 = ssub.s32 %s19, %s26
    %s145 = sor.u32 %s143, %s144
    %p146 = scmp.eq.s32.totalorder %s145, 0
    %s148 = sadd.s32 %s147, 1
    %s149 = scalar_select %p146, %s147, %s148
    %p152 = pneg %p146
    %p153 = scmp.eq.s32.totalorder %s11, 1
    %p154 = por %p152, %p153
    %p155 = scmp.ne.s32.totalorder %s147, %s150
    %p156 = scmp.eq.s32.totalorder %s11, 0
    %p157 = por %p155, %p156
    %p158 = scmp.ne.s32.totalorder %s147, %s150
    %p159 = scmp.eq.s32.totalorder %s16, 1
    %p160 = por %p158, %p159
    %p161 = scmp.ne.s32.totalorder %s150, %s151
    %p162 = scmp.eq.s32.totalorder %s16, 0
    %p163 = por %p161, %p162
    %p164 = scmp.ne.s32.totalorder %s150, %s151
    %p165 = scmp.eq.s32.totalorder %s17, 1
    %p166 = por %p164, %p165
    %p168 = scmp.ne.s32.totalorder %s151, %s167
    %p169 = scmp.eq.s32.totalorder %s17, 0
    %p170 = por %p168, %p169
    %p171 = scmp.le.s32.totalorder 1, %s11
    %p172 = scmp.lt.s32.totalorder %s11, 3
    %p173 = pnand %p171, %p172
    %p174 = pneg %p173
    // Predicated region
    $region9: #{ps_up_forward.1} parent=5 // pred_check
      _
    $region10: #{ps_up_forward.1} parent=5 // pred_check_branch
      %176 = sbr.rel (%p173) target = $region12
    $region11: #{ps_up_forward.1} parent=5 // pred_region
      %s177 = ssub.s32 %s11, 1
      // Predicated region
      $region13: #{ps_up_forward.1} parent=11 // pred_check
        %p178 = pneg %p72
      $region14: #{ps_up_forward.1} parent=11 // pred_check_branch
        %180 = sbr.rel (%p178) target = $region16
      $region15: #{ps_up_forward.1} parent=11 // pred_region
        _
      $region16: #{ps_up_forward.1} parent=11 // pred_fallthru
        _
      // Predicated region
      $region17: #{ps_up_forward.1} parent=11 // pred_check
        %p181 = pneg %p93
      $region18: #{ps_up_forward.1} parent=11 // pred_check_branch
        %183 = sbr.rel (%p181) target = $region20
      $region19: #{ps_up_forward.1} parent=11 // pred_region
        _
      $region20: #{ps_up_forward.1} parent=11 // pred_fallthru
        _
      // Predicated region
      $region21: #{ps_up_forward.1} parent=11 // pred_check
        %p184 = pneg %p114
      $region22: #{ps_up_forward.1} parent=11 // pred_check_branch
        %186 = sbr.rel (%p184) target = $region24
      $region23: #{ps_up_forward.1} parent=11 // pred_region
        _
      $region24: #{ps_up_forward.1} parent=11 // pred_fallthru
        _
      // Predicated region
      $region25: #{ps_up_forward.1} parent=11 // pred_check
        %p187 = pneg %p135
      $region26: #{ps_up_forward.1} parent=11 // pred_check_branch
        %189 = sbr.rel (%p187) target = $region28
      $region27: #{ps_up_forward.1} parent=11 // pred_region
        _
      $region28: #{ps_up_forward.1} parent=11 // pred_fallthru
        _
    $region12: #{ps_up_forward.1} parent=5 // pred_fallthru
      _
    %p190 = scmp.lt.s32.totalorder %s11, 2
    // Predicated region
    $region29: #{ps_up_forward.1} parent=5 // pred_check
      %p191 = pneg %p190
    $region30: #{ps_up_forward.1} parent=5 // pred_check_branch
      %193 = sbr.rel (%p191) target = $region32
    $region31: #{ps_up_forward.1} parent=5 // pred_region
      // Predicated region
      $region33: #{ps_up_forward.1} parent=31 // pred_check
        %p194 = pneg %p45
      $region34: #{ps_up_forward.1} parent=31 // pred_check_branch
        %196 = sbr.rel (%p194) target = $region36
      $region35: #{ps_up_forward.1} parent=31 // pred_region
        %s197 = smul.u32 2, %s19
        %p198 = scmp.lt.s32.totalorder %s18, 1
        %s199 = scalar_select %p198, %s18, 1
        %p200 = scmp.lt.s32.totalorder %s197, 1
        %s201 = scalar_select %p200, %s197, 1
        %s202 = smul.addr %s199, 8
        %s203 = sadd.s32 %s201, %s202
        %s204 = smul.addr %s203, 8
        %s205 = scalar_lea.vmem %s0, %s204
        %s206 = smul.u32 2, %s19
      $region36: #{ps_up_forward.1} parent=31 // pred_fallthru
        _
    $region32: #{ps_up_forward.1} parent=5 // pred_fallthru
      _
    %p207 = scmp.le.s32.totalorder 1, %s11
    %p208 = scmp.lt.s32.totalorder %s11, 3
    %p209 = pnand %p207, %p208
    %p210 = pneg %p209
    // Predicated region
    $region37: #{ps_up_forward.1} parent=5 // pred_check
      _
    $region38: #{ps_up_forward.1} parent=5 // pred_check_branch
      %212 = sbr.rel (%p209) target = $region40
    $region39: #{ps_up_forward.1} parent=5 // pred_region
      %s213 = ssub.s32 %s11, 1
      %s214 = smul.u32 2, %s21
      %p215 = scmp.lt.s32.totalorder %s20, 1
      %s216 = scalar_select %p215, %s20, 1
      %p217 = scmp.lt.s32.totalorder %s214, 1
      %s218 = scalar_select %p217, %s214, 1
      %s219 = smul.addr %s216, 8
      %s220 = sadd.s32 %s218, %s219
      %s221 = smul.addr %s220, 8
      %s222 = scalar_lea.vmem %s0, %s221
      %p223 = pneg %p51
      %p224 = pneg %p48
      %p225 = pneg %p72
      %p226 = pneg %p69
      %p227 = pneg %p93
      %p228 = pneg %p90
      %p229 = pneg %p114
      %p230 = pneg %p111
      %p231 = pneg %p135
      %p232 = pneg %p132
      %p233 = pneg %p163
      %p234 = pneg %p160
      %s235 = smul.u32 2, %s21
      %p236 = scmp.lt.s32.totalorder %s20, 1
      %s237 = scalar_select %p236, %s20, 1
      %p238 = scmp.lt.s32.totalorder %s235, 1
      %s239 = scalar_select %p238, %s235, 1
      %s240 = smul.addr %s237, 16
      %s241 = sadd.s32 %s239, %s240
      %s242 = smul.addr %s241, 8
      %s243 = scalar_lea.vmem %s5, %s242
      %s244 = smul.u32 2, %s21
      %p245 = scmp.lt.s32.totalorder %s20, 1
      %s246 = scalar_select %p245, %s20, 1
      %p247 = scmp.lt.s32.totalorder %s244, 1
      %s248 = scalar_select %p247, %s244, 1
      %s249 = smul.addr %s246, 8
      %s250 = sadd.s32 %s248, %s249
      %s251 = smul.addr %s250, 8
      %s252 = scalar_lea.vmem %s0, %s251
      %s253 = smul.u32 2, %s21
      %s254 = smul.u32 2, %s21
      %p255 = scmp.lt.s32.totalorder %s20, 1
      %s256 = scalar_select %p255, %s20, 1
      %p257 = scmp.lt.s32.totalorder %s254, 1
      %s258 = scalar_select %p257, %s254, 1
      %s259 = smul.addr %s256, 16
      %s260 = sadd.s32 %s258, %s259
      %s261 = smul.addr %s260, 8
      %s262 = scalar_lea.vmem %s5, %s261
      %s263 = smul.u32 2, %s21
      %v264 = vld [vmem:[%s252] sm:$0xff]
      %v265 = vld [vmem:[%s252 + $0x8] sm:$0xff]
      %v266 = vld [vmem:[%s252 + $0x10] sm:$0xff]
      %v267 = vld [vmem:[%s252 + $0x18] sm:$0xff]
      %v268 = vld [vmem:[%s252 + $0x20] sm:$0xff]
      %v269 = vld [vmem:[%s252 + $0x28] sm:$0xff]
      %v270 = vld [vmem:[%s252 + $0x30] sm:$0xff]
      %v271 = vld [vmem:[%s252 + $0x38] sm:$0xff]
      %v272 = vld [vmem:[%s1] sm:$0xff]
      %v273 = vld [vmem:[%s1 + $0x8] sm:$0xff]
      %v274 = vld [vmem:[%s2] sm:$0xff]
      %v275 = vld [vmem:[%s2 + $0x8] sm:$0xff]
      %277 = vset.pattern.permute.xlu0 0
      %278 = vperm.xlu0 %277, %v274
      %v279 = vpop.permute.xlu0 %278
      %282 = vset.pattern.permute.xlu0 0
      %283 = vperm.xlu0 %282, %v275
      %v284 = vpop.permute.xlu0 %283
      %vm286 = vcmask 261120
      %v288 = vsel %vm286, %v272, 0
      %v291 = vsel %vm286, %v273, 0
      %293 = vmatprep.subr.mxu0 %v265
      %294 = vmatpush1.msra.mxu0 %v264
      %295 = vmatprep.subr.mxu0 %v267
      %296 = vmatpush1.msra.mxu0 %v266
      %297 = vmatprep.subr.mxu0 %v269
      %298 = vmatpush1.msra.mxu0 %v268
      %299 = vmatprep.subr.mxu0 %v271
      %300 = vmatpush1.msra.mxu0 %v270
      %301 = vmatprep.subr.mxu0 0.0
      %302 = vmatpush1.msra.mxu0 0.0
      %303 = vmatprep.subr.mxu0 0.0
      %304 = vmatpush1.msra.mxu0 0.0
      %305 = vmatprep.subr.mxu0 0.0
      %306 = vmatpush1.msra.mxu0 0.0
      %307 = vmatprep.subr.mxu0 0.0
      %308 = vmatpush1.msra.mxu0 0.0
      %309 = vmatprep.subr.mxu0 0.0
      %310 = vmatpush1.msra.mxu0 0.0
      %311 = vmatprep.subr.mxu0 0.0
      %312 = vmatpush1.msra.mxu0 0.0
      %313 = vmatprep.subr.mxu0 0.0
      %314 = vmatpush1.msra.mxu0 0.0
      %315 = vmatprep.subr.mxu0 0.0
      %316 = vmatpush1.msra.mxu0 0.0
      %317 = vmatprep.subr.mxu0 0.0
      %318 = vmatpush1.msra.mxu0 0.0
      %319 = vmatprep.subr.mxu0 0.0
      %320 = vmatpush1.msra.mxu0 0.0
      %321 = vmatprep.subr.mxu0 0.0
      %322 = vmatpush1.msra.mxu0 0.0
      %323 = vmatprep.subr.mxu0 0.0
      %324 = vmatpush1.msra.mxu0 0.0
      %325 = vmatprep.subr.mxu0 0.0
      %326 = vmatpush1.msra.mxu0 0.0
      %327 = vmatprep.subr.mxu0 0.0
      %328 = vmatpush1.msra.mxu0 0.0
      %329 = vmatprep.subr.mxu0 0.0
      %330 = vmatpush1.msra.mxu0 0.0
      %331 = vmatprep.subr.mxu0 0.0
      %332 = vmatpush1.msra.mxu0 0.0
      %333 = vmatprep.subr.mxu0 0.0
      %334 = vmatpush1.msra.mxu0 0.0
      %335 = vmatprep.subr.mxu0 0.0
      %336 = vmatpush1.msra.mxu0 0.0
      %337 = vmatprep.subr.mxu0 0.0
      %338 = vmatpush1.msra.mxu0 0.0
      %339 = vmatprep.subr.mxu0 0.0
      %340 = vmatpush1.msra.mxu0 0.0
      %341 = vmatprep.subr.mxu0 0.0
      %342 = vmatpush1.msra.mxu0 0.0
      %343 = vmatprep.subr.mxu0 0.0
      %344 = vmatpush1.msra.mxu0 0.0
      %345 = vmatprep.subr.mxu0 0.0
      %346 = vmatpush1.msra.mxu0 0.0
      %347 = vmatprep.subr.mxu0 0.0
      %348 = vmatpush1.msra.mxu0 0.0
      %349 = vmatprep.subr.mxu0 0.0
      %350 = vmatpush1.msra.mxu0 0.0
      %351 = vmatprep.subr.mxu0 0.0
      %352 = vmatpush1.msra.mxu0 0.0
      %353 = vmatprep.subr.mxu0 0.0
      %354 = vmatpush1.msra.mxu0 0.0
      %355 = vmatprep.subr.mxu0 0.0
      %356 = vmatpush1.msra.mxu0 0.0
      %357 = vmatprep.mubr.f32.mxu0 0.0
      %358 = vmatmul.mubr.f32.gmra.mrb[0].mxu0 %v288
      %v359 = vpop.f32.mrb[0].mxu0
      %v360 = vadd.f32 %v279, %v359
      %v361 = vpop.f32.mrb[0].mxu0
      %v362 = vadd.f32 %v279, %v361
      %363 = vmatprep.mubr.f32.mxu0 0.0
      %364 = vmatmul.mubr.f32.gmra.mrb[0].mxu0 %v291
      %v365 = vpop.f32.mrb[0].mxu0
      %v366 = vadd.f32 %v284, %v365
      %v367 = vpop.f32.mrb[0].mxu0
      %v368 = vadd.f32 %v284, %v367
      %369 = vdwg.mxu0
      %v370 = vmax.f32 %v360, 0.0
      %v371 = vmax.f32 %v362, 0.0
      %v372 = vmax.f32 %v366, 0.0
      %v373 = vmax.f32 %v368, 0.0
      %v374 = vld [vmem:[%s3] sm:$0xff]
      %v375 = vld [vmem:[%s3 + $0x8] sm:$0xff]
      %v376 = vld [vmem:[%s3 + $0x10] sm:$0xff]
      %v377 = vld [vmem:[%s3 + $0x18] sm:$0xff]
      %v378 = vld [vmem:[%s3 + $0x20] sm:$0xff]
      %v379 = vld [vmem:[%s3 + $0x28] sm:$0xff]
      %v380 = vld [vmem:[%s3 + $0x30] sm:$0xff]
      %v381 = vld [vmem:[%s3 + $0x38] sm:$0xff]
      %v382 = vld [vmem:[%s4] sm:$0xff]
      %v383 = vld [vmem:[%s4 + $0x8] sm:$0xff]
      %v384 = vld [vmem:[%s4 + $0x10] sm:$0xff]
      %v385 = vld [vmem:[%s4 + $0x18] sm:$0xff]
      %v386 = vld [vmem:[%s4 + $0x20] sm:$0xff]
      %v387 = vld [vmem:[%s4 + $0x28] sm:$0xff]
      %v388 = vld [vmem:[%s4 + $0x30] sm:$0xff]
      %v389 = vld [vmem:[%s4 + $0x38] sm:$0xff]
      %391 = vset.pattern.permute.xlu0 0
      %392 = vperm.xlu0 %391, %v382
      %v393 = vpop.permute.xlu0 %392
      %396 = vset.pattern.permute.xlu0 0
      %397 = vperm.xlu0 %396, %v383
      %v398 = vpop.permute.xlu0 %397
      %401 = vset.pattern.permute.xlu0 0
      %402 = vperm.xlu0 %401, %v384
      %v403 = vpop.permute.xlu0 %402
      %406 = vset.pattern.permute.xlu0 0
      %407 = vperm.xlu0 %406, %v385
      %v408 = vpop.permute.xlu0 %407
      %411 = vset.pattern.permute.xlu0 0
      %412 = vperm.xlu0 %411, %v386
      %v413 = vpop.permute.xlu0 %412
      %416 = vset.pattern.permute.xlu0 0
      %417 = vperm.xlu0 %416, %v387
      %v418 = vpop.permute.xlu0 %417
      %421 = vset.pattern.permute.xlu0 0
      %422 = vperm.xlu0 %421, %v388
      %v423 = vpop.permute.xlu0 %422
      %426 = vset.pattern.permute.xlu0 0
      %427 = vperm.xlu0 %426, %v389
      %v428 = vpop.permute.xlu0 %427
      %vm430 = vcmask 130048
      %v432 = vsel %vm430, %v374, 0
      %v435 = vsel %vm430, %v375, 0
      %v438 = vsel %vm430, %v376, 0
      %v441 = vsel %vm430, %v377, 0
      %v444 = vsel %vm430, %v378, 0
      %v447 = vsel %vm430, %v379, 0
      %v450 = vsel %vm430, %v380, 0
      %v453 = vsel %vm430, %v381, 0
      %455 = vmatprep.subr.mxu0 %v371
      %456 = vmatpush1.msra.mxu0 %v370
      %457 = vmatprep.subr.mxu0 %v373
      %458 = vmatpush1.msra.mxu0 %v372
      %459 = vmatprep.subr.mxu0 0.0
      %460 = vmatpush1.msra.mxu0 0.0
      %461 = vmatprep.subr.mxu0 0.0
      %462 = vmatpush1.msra.mxu0 0.0
      %463 = vmatprep.subr.mxu0 0.0
      %464 = vmatpush1.msra.mxu0 0.0
      %465 = vmatprep.subr.mxu0 0.0
      %466 = vmatpush1.msra.mxu0 0.0
      %467 = vmatprep.subr.mxu0 0.0
      %468 = vmatpush1.msra.mxu0 0.0
      %469 = vmatprep.subr.mxu0 0.0
      %470 = vmatpush1.msra.mxu0 0.0
      %471 = vmatprep.subr.mxu0 0.0
      %472 = vmatpush1.msra.mxu0 0.0
      %473 = vmatprep.subr.mxu0 0.0
      %474 = vmatpush1.msra.mxu0 0.0
      %475 = vmatprep.subr.mxu0 0.0
      %476 = vmatpush1.msra.mxu0 0.0
      %477 = vmatprep.subr.mxu0 0.0
      %478 = vmatpush1.msra.mxu0 0.0
      %479 = vmatprep.subr.mxu0 0.0
      %480 = vmatpush1.msra.mxu0 0.0
      %481 = vmatprep.subr.mxu0 0.0
      %482 = vmatpush1.msra.mxu0 0.0
      %483 = vmatprep.subr.mxu0 0.0
      %484 = vmatpush1.msra.mxu0 0.0
      %485 = vmatprep.subr.mxu0 0.0
      %486 = vmatpush1.msra.mxu0 0.0
      %487 = vmatprep.subr.mxu0 0.0
      %488 = vmatpush1.msra.mxu0 0.0
      %489 = vmatprep.subr.mxu0 0.0
      %490 = vmatpush1.msra.mxu0 0.0
      %491 = vmatprep.subr.mxu0 0.0
      %492 = vmatpush1.msra.mxu0 0.0
      %493 = vmatprep.subr.mxu0 0.0
      %494 = vmatpush1.msra.mxu0 0.0
      %495 = vmatprep.subr.mxu0 0.0
      %496 = vmatpush1.msra.mxu0 0.0
      %497 = vmatprep.subr.mxu0 0.0
      %498 = vmatpush1.msra.mxu0 0.0
      %499 = vmatprep.subr.mxu0 0.0
      %500 = vmatpush1.msra.mxu0 0.0
      %501 = vmatprep.subr.mxu0 0.0
      %502 = vmatpush1.msra.mxu0 0.0
      %503 = vmatprep.subr.mxu0 0.0
      %504 = vmatpush1.msra.mxu0 0.0
      %505 = vmatprep.subr.mxu0 0.0
      %506 = vmatpush1.msra.mxu0 0.0
      %507 = vmatprep.subr.mxu0 0.0
      %508 = vmatpush1.msra.mxu0 0.0
      %509 = vmatprep.subr.mxu0 0.0
      %510 = vmatpush1.msra.mxu0 0.0
      %511 = vmatprep.subr.mxu0 0.0
      %512 = vmatpush1.msra.mxu0 0.0
      %513 = vmatprep.subr.mxu0 0.0
      %514 = vmatpush1.msra.mxu0 0.0
      %515 = vmatprep.subr.mxu0 0.0
      %516 = vmatpush1.msra.mxu0 0.0
      %517 = vmatprep.subr.mxu0 0.0
      %518 = vmatpush1.msra.mxu0 0.0
      %519 = vmatprep.mubr.f32.mxu0 0.0
      %520 = vmatmul.mubr.f32.gmra.mrb[0].mxu0 %v432
      %v521 = vpop.f32.mrb[0].mxu0
      %v522 = vadd.f32 %v393, %v521
      %v523 = vpop.f32.mrb[0].mxu0
      %v524 = vadd.f32 %v393, %v523
      %525 = vmatprep.mubr.f32.mxu0 0.0
      %526 = vmatmul.mubr.f32.gmra.mrb[0].mxu0 %v435
      %v527 = vpop.f32.mrb[0].mxu0
      %v528 = vadd.f32 %v398, %v527
      %v529 = vpop.f32.mrb[0].mxu0
      %v530 = vadd.f32 %v398, %v529
      %531 = vmatprep.mubr.f32.mxu0 0.0
      %532 = vmatmul.mubr.f32.gmra.mrb[0].mxu0 %v438
      %v533 = vpop.f32.mrb[0].mxu0
      %v534 = vadd.f32 %v403, %v533
      %v535 = vpop.f32.mrb[0].mxu0
      %v536 = vadd.f32 %v403, %v535
      %537 = vmatprep.mubr.f32.mxu0 0.0
      %538 = vmatmul.mubr.f32.gmra.mrb[0].mxu0 %v441
      %v539 = vpop.f32.mrb[0].mxu0
      %v540 = vadd.f32 %v408, %v539
      %v541 = vpop.f32.mrb[0].mxu0
      %v542 = vadd.f32 %v408, %v541
      %543 = vmatprep.mubr.f32.mxu0 0.0
      %544 = vmatmul.mubr.f32.gmra.mrb[0].mxu0 %v444
      %v545 = vpop.f32.mrb[0].mxu0
      %v546 = vadd.f32 %v413, %v545
      %v547 = vpop.f32.mrb[0].mxu0
      %v548 = vadd.f32 %v413, %v547
      %549 = vmatprep.mubr.f32.mxu0 0.0
      %550 = vmatmul.mubr.f32.gmra.mrb[0].mxu0 %v447
      %v551 = vpop.f32.mrb[0].mxu0
      %v552 = vadd.f32 %v418, %v551
      %v553 = vpop.f32.mrb[0].mxu0
      %v554 = vadd.f32 %v418, %v553
      %555 = vmatprep.mubr.f32.mxu0 0.0
      %556 = vmatmul.mubr.f32.gmra.mrb[0].mxu0 %v450
      %v557 = vpop.f32.mrb[0].mxu0
      %v558 = vadd.f32 %v423, %v557
      %v559 = vpop.f32.mrb[0].mxu0
      %v560 = vadd.f32 %v423, %v559
      %561 = vmatprep.mubr.f32.mxu0 0.0
      %562 = vmatmul.mubr.f32.gmra.mrb[0].mxu0 %v453
      %v563 = vpop.f32.mrb[0].mxu0
      %v564 = vadd.f32 %v428, %v563
      %v565 = vpop.f32.mrb[0].mxu0
      %v566 = vadd.f32 %v428, %v565
      %567 = vdwg.mxu0
      %v568 = vmax.f32 %v522, 0.0
      %v569 = vmax.f32 %v524, 0.0
      %v570 = vmax.f32 %v528, 0.0
      %v571 = vmax.f32 %v530, 0.0
      %v572 = vmax.f32 %v534, 0.0
      %v573 = vmax.f32 %v536, 0.0
      %v574 = vmax.f32 %v540, 0.0
      %v575 = vmax.f32 %v542, 0.0
      %v576 = vmax.f32 %v546, 0.0
      %v577 = vmax.f32 %v548, 0.0
      %v578 = vmax.f32 %v552, 0.0
      %v579 = vmax.f32 %v554, 0.0
      %v580 = vmax.f32 %v558, 0.0
      %v581 = vmax.f32 %v560, 0.0
      %v582 = vmax.f32 %v564, 0.0
      %v583 = vmax.f32 %v566, 0.0
      %584 = vst [vmem:[%s262] sm:$0xff] %v568
      %585 = vst [vmem:[%s262 + $0x8] sm:$0xff] %v569
      %586 = vst [vmem:[%s262 + $0x10] sm:$0xff] %v570
      %587 = vst [vmem:[%s262 + $0x18] sm:$0xff] %v571
      %588 = vst [vmem:[%s262 + $0x20] sm:$0xff] %v572
      %589 = vst [vmem:[%s262 + $0x28] sm:$0xff] %v573
      %590 = vst [vmem:[%s262 + $0x30] sm:$0xff] %v574
      %591 = vst [vmem:[%s262 + $0x38] sm:$0xff] %v575
      %592 = vst [vmem:[%s262 + $0x40] sm:$0xff] %v576
      %593 = vst [vmem:[%s262 + $0x48] sm:$0xff] %v577
      %594 = vst [vmem:[%s262 + $0x50] sm:$0xff] %v578
      %595 = vst [vmem:[%s262 + $0x58] sm:$0xff] %v579
      %596 = vst [vmem:[%s262 + $0x60] sm:$0xff] %v580
      %597 = vst [vmem:[%s262 + $0x68] sm:$0xff] %v581
      %598 = vst [vmem:[%s262 + $0x70] sm:$0xff] %v582
      %599 = vst [vmem:[%s262 + $0x78] sm:$0xff] %v583
      %s600 = smul.u32 2, %s21
      %p601 = scmp.lt.s32.totalorder %s20, 1
      %s602 = scalar_select %p601, %s20, 1
      %p603 = scmp.lt.s32.totalorder %s600, 1
      %s604 = scalar_select %p603, %s600, 1
      %s605 = smul.addr %s602, 16
      %s606 = sadd.s32 %s604, %s605
      %s607 = smul.addr %s606, 8
      %s608 = scalar_lea.vmem %s5, %s607
      // Predicated region
      $region41: #{ps_up_forward.1} parent=39 // pred_check
        %p609 = pneg %p160
      $region42: #{ps_up_forward.1} parent=39 // pred_check_branch
        %611 = sbr.rel (%p609) target = $region44
      $region43: #{ps_up_forward.1} parent=39 // pred_region
        %s612 = smul.u32 2, %s21
      $region44: #{ps_up_forward.1} parent=39 // pred_fallthru
        _
    $region40: #{ps_up_forward.1} parent=5 // pred_fallthru
      _
    %p613 = scmp.le.s32.totalorder 2, %s11
    // Predicated region
    $region45: #{ps_up_forward.1} parent=5 // pred_check
      %p614 = pneg %p613
    $region46: #{ps_up_forward.1} parent=5 // pred_check_branch
      %616 = sbr.rel (%p614) target = $region48
    $region47: #{ps_up_forward.1} parent=5 // pred_region
      %s617 = ssub.s32 %s11, 2
      // Predicated region
      $region49: #{ps_up_forward.1} parent=47 // pred_check
        %p618 = pneg %p166
      $region50: #{ps_up_forward.1} parent=47 // pred_check_branch
        %620 = sbr.rel (%p618) target = $region52
      $region51: #{ps_up_forward.1} parent=47 // pred_region
        %s621 = smul.u32 2, %s23
        %p622 = scmp.lt.s32.totalorder %s22, 1
        %s623 = scalar_select %p622, %s22, 1
        %p624 = scmp.lt.s32.totalorder %s621, 1
        %s625 = scalar_select %p624, %s621, 1
        %s626 = smul.addr %s623, 16
        %s627 = sadd.s32 %s625, %s626
        %s628 = smul.addr %s627, 8
        %s629 = scalar_lea.vmem %s5, %s628
      $region52: #{ps_up_forward.1} parent=47 // pred_fallthru
        _
    $region48: #{ps_up_forward.1} parent=5 // pred_fallthru
      _
  $region6: #{ps_up_forward.1} parent=0 // loop_footer
    %s15 = sadd.s32 1, %s11
  $region7: #{ps_up_forward.1} parent=0 // loop_footer_branch
    %10 = sbr.rel target = $region3
  $region8: #{ps_up_forward.1} parent=0 // loop_exit
    _

</llo_original>
